<compile_context>
chip_gen: v7x
topology: tpu7x:2x2x1
jax: 0.10.0
libtpu: 0.0.40
codegen_flags: <defaults>
</compile_context>

<pallas_src>
import functools
import math

import jax
import jax.numpy as jnp
from jax.experimental import pallas as pl
from jax.experimental.pallas import tpu as pltpu


def _round_up(x, m):
    return ((x + m - 1) // m) * m


def _fused_linear_kernel(x_ref, w_ref, b_ref, o_ref, acc_ref):
    k = pl.program_id(2)

    @pl.when(k == 0)
    def _init():
        # Fold the bias into the accumulator once (not re-added every K step).
        acc_ref[...] = jnp.broadcast_to(
            b_ref[...].astype(jnp.float32), acc_ref.shape
        )

    acc_ref[...] += jnp.dot(
        x_ref[...], w_ref[...], preferred_element_type=jnp.float32
    )

    @pl.when(k == pl.num_programs(2) - 1)
    def _finalize():
        o_ref[...] = acc_ref[...].astype(o_ref.dtype)


@jax.jit
def fused_multi_head_linear(x, w_cat, b_cat):
    """Compute x @ w_cat + b_cat with TPU-friendly padding and tiling."""
    B, F = x.shape
    _, N = w_cat.shape
    itemsize = jnp.dtype(x.dtype).itemsize

    # ---- pad to sublane / lane aligned shapes ----
    Bp = max(_round_up(B, 8), 8)        # sublane (>=8 rows for f32)
    Np = max(_round_up(N, 128), 128)    # lane-dense output (>=128, mult of 128)
    Fp = max(_round_up(F, 128), 128)    # lane-dense contraction dim

    # ---- tile plan (small enough for v5e 16 MiB scoped / v7x 64 MiB VMEM) ----
    tm = min(Bp, 256)
    tn = min(Np, 256)
    tk = min(Fp, 512)
    Bp = _round_up(Bp, tm)
    Np = _round_up(Np, tn)
    Fp = _round_up(Fp, tk)

    xp = jnp.zeros((Bp, Fp), x.dtype).at[:B, :F].set(x)
    wp = jnp.zeros((Fp, Np), w_cat.dtype).at[:F, :N].set(w_cat)
    bp = jnp.zeros((1, Np), b_cat.dtype).at[:, :N].set(b_cat)

    grid = (Bp // tm, Np // tn, Fp // tk)
    flops = 2 * Bp * Np * Fp
    bytes_accessed = (Bp * Fp + Fp * Np + Np + Bp * Np) * itemsize

    out = pl.pallas_call(
        _fused_linear_kernel,
        out_shape=jax.ShapeDtypeStruct((Bp, Np), x.dtype),
        grid=grid,
        in_specs=[
            pl.BlockSpec((tm, tk), lambda i, j, k: (i, k)),   # x tile
            pl.BlockSpec((tk, tn), lambda i, j, k: (k, j)),   # w tile
            pl.BlockSpec((1, tn), lambda i, j, k: (0, j)),    # bias tile
        ],
        out_specs=pl.BlockSpec((tm, tn), lambda i, j, k: (i, j)),
        scratch_shapes=[pltpu.VMEM((tm, tn), jnp.float32)],
        compiler_params=pltpu.CompilerParams(
            dimension_semantics=("parallel", "parallel", "arbitrary"),
        ),
        cost_estimate=pl.CostEstimate(
            flops=flops, transcendentals=0, bytes_accessed=bytes_accessed
        ),
    )(xp, wp, bp)

    return out[:B, :N]


class MultiTargetLayerPallas:
    """JAX/Pallas equivalent of the PyTorch MultiTargetLayer (fused heads)."""

    def __init__(self, num_features, num_class_list, key):
        assert isinstance(num_class_list, list)
        self.num_features = num_features
        self.num_class_list = num_class_list
        self.params = []
        bound = 1.0 / math.sqrt(num_features)
        for nc in num_class_list:
            key, kw, kb = jax.random.split(key, 3)
            # PyTorch nn.Linear default init: U(-1/sqrt(F), 1/sqrt(F))
            w = jax.random.uniform(
                kw, (num_features, nc), jnp.float32, minval=-bound, maxval=bound
            )
            b = jax.random.uniform(
                kb, (1, nc), jnp.float32, minval=-bound, maxval=bound
            )
            self.params.append((w, b))

        # Fuse all heads once: concat along the class axis.
        self.w_cat = jnp.concatenate([w for (w, _) in self.params], axis=1)
        self.b_cat = jnp.concatenate([b for (_, b) in self.params], axis=1)
        offs = []
        off = 0
        for nc in num_class_list:
            offs.append(off)
            off += nc
        self.offsets = offs
        self.total_classes = off

    def __call__(self, x):
        # One kernel launch for all heads, then slice per-head logits.
        y = fused_multi_head_linear(x, self.w_cat, self.b_cat)
        return [
            y[:, off:off + nc]
            for off, nc in zip(self.offsets, self.num_class_list)
        ]


if __name__ == "__main__":
    key = jax.random.PRNGKey(0)
    key, kx = jax.random.split(key)

    batch = 2
    num_features = 32
    num_class_list = [4, 8, 16]

    x = jax.random.normal(kx, (batch, num_features), dtype=jnp.float32)

    layer = MultiTargetLayerPallas(num_features, num_class_list, key)
    outs = layer(x)
    outs = [jax.block_until_ready(o) for o in outs]

    # Reference check against plain JAX (per-head x @ W + b).
    ok = True
    for (w, b), nc, o in zip(layer.params, num_class_list, outs):
        ref = x @ w + b
        assert o.shape == (batch, nc)
        ok &= bool(jnp.allclose(o, ref, atol=1e-5, rtol=1e-5))

    if ok:
        print("KERNEL_OK")
</pallas_src>

<mosaic_0001>
module attributes {stable_mosaic.version = 11 : i64} {
  func.func @_fused_linear_kernel(%arg0: i32, %arg1: i32, %arg2: i32, %arg3: memref<8x128xf32, #tpu.memory_space<vmem>>, %arg4: memref<128x128xf32, #tpu.memory_space<vmem>>, %arg5: memref<1x128xf32, #tpu.memory_space<vmem>>, %arg6: memref<8x128xf32, #tpu.memory_space<vmem>>, %arg7: memref<8x128xf32, #tpu.memory_space<vmem>>) attributes {dimension_semantics = [#tpu.dimension_semantics<parallel>, #tpu.dimension_semantics<parallel>, #tpu.dimension_semantics<arbitrary>], iteration_bounds = array<i64: 1, 1, 1>, scalar_prefetch = 0 : i64, scratch_operands = 1 : i64, tpu.core_type = #tpu.core_type<tc>, window_params = [{transform_indices = @transform_0, window_bounds = array<i64: 8, 128>}, {transform_indices = @transform_1, window_bounds = array<i64: 128, 128>}, {transform_indices = @transform_2, window_bounds = array<i64: 1, 128>}, {transform_indices = @transform_3, window_bounds = array<i64: 8, 128>}]} {
    %c0_i32 = arith.constant 0 : i32
    %0 = arith.cmpi eq, %arg2, %c0_i32 : i32
    %1 = arith.extui %0 : i1 to i32
    %c0_i32_0 = arith.constant 0 : i32
    %2 = arith.cmpi ne, %1, %c0_i32_0 : i32
    scf.if %2 {
      %c0_10 = arith.constant 0 : index
      %c0_11 = arith.constant 0 : index
      %12 = vector.load %arg5[%c0_10, %c0_11] : memref<1x128xf32, #tpu.memory_space<vmem>>, vector<1x128xf32>
      %13 = vector.shape_cast %12 : vector<1x128xf32> to vector<1x128xf32>
      %14 = vector.broadcast %13 : vector<1x128xf32> to vector<8x128xf32>
      %c0_12 = arith.constant 0 : index
      %c0_13 = arith.constant 0 : index
      %15 = vector.load %arg7[%c0_12, %c0_13] : memref<8x128xf32, #tpu.memory_space<vmem>>, vector<8x128xf32>
      tpu.vector_store %arg7[%c0_12, %c0_13], %14 {strides = array<i32>} : memref<8x128xf32, #tpu.memory_space<vmem>>, vector<8x128xf32>,
    } else {
    }
    %c0 = arith.constant 0 : index
    %c0_1 = arith.constant 0 : index
    %3 = vector.load %arg7[%c0, %c0_1] : memref<8x128xf32, #tpu.memory_space<vmem>>, vector<8x128xf32>
    %c0_2 = arith.constant 0 : index
    %c0_3 = arith.constant 0 : index
    %4 = vector.load %arg3[%c0_2, %c0_3] : memref<8x128xf32, #tpu.memory_space<vmem>>, vector<8x128xf32>
    %c0_4 = arith.constant 0 : index
    %c0_5 = arith.constant 0 : index
    %5 = vector.load %arg4[%c0_4, %c0_5] : memref<128x128xf32, #tpu.memory_space<vmem>>, vector<128x128xf32>
    %cst = arith.constant dense<0.000000e+00> : vector<8x128xf32>
    %6 = tpu.matmul %4, %5, %cst {dimension_numbers = #tpu.dot_dimension_numbers<[1], [0], [0], [1], [0, 0, 1, 1], [], []>} : vector<8x128xf32>, vector<128x128xf32>, vector<8x128xf32> -> vector<8x128xf32>
    %7 = arith.addf %3, %6 : vector<8x128xf32>
    %c0_6 = arith.constant 0 : index
    %c0_7 = arith.constant 0 : index
    %8 = vector.load %arg7[%c0_6, %c0_7] : memref<8x128xf32, #tpu.memory_space<vmem>>, vector<8x128xf32>
    tpu.vector_store %arg7[%c0_6, %c0_7], %7 {strides = array<i32>} : memref<8x128xf32, #tpu.memory_space<vmem>>, vector<8x128xf32>,
    %c0_i32_8 = arith.constant 0 : i32
    %9 = arith.cmpi eq, %arg2, %c0_i32_8 : i32
    %10 = arith.extui %9 : i1 to i32
    %c0_i32_9 = arith.constant 0 : i32
    %11 = arith.cmpi ne, %10, %c0_i32_9 : i32
    scf.if %11 {
      %c0_10 = arith.constant 0 : index
      %c0_11 = arith.constant 0 : index
      %12 = vector.load %arg7[%c0_10, %c0_11] : memref<8x128xf32, #tpu.memory_space<vmem>>, vector<8x128xf32>
      %c0_12 = arith.constant 0 : index
      %c0_13 = arith.constant 0 : index
      %13 = vector.load %arg6[%c0_12, %c0_13] : memref<8x128xf32, #tpu.memory_space<vmem>>, vector<8x128xf32>
      tpu.vector_store %arg6[%c0_12, %c0_13], %12 {strides = array<i32>} : memref<8x128xf32, #tpu.memory_space<vmem>>, vector<8x128xf32>,
    } else {
    }
    return
  }
  func.func @transform_0(%arg0: i32, %arg1: i32, %arg2: i32) -> (i32, i32) {
    %c0_i32 = arith.constant 0 : i32
    return %arg0, %arg2 : i32, i32
  }
  func.func @transform_1(%arg0: i32, %arg1: i32, %arg2: i32) -> (i32, i32) {
    %c0_i32 = arith.constant 0 : i32
    return %arg2, %arg1 : i32, i32
  }
  func.func @transform_2(%arg0: i32, %arg1: i32, %arg2: i32) -> (i32, i32) {
    %c0_i32 = arith.constant 0 : i32
    %c0_i32_0 = arith.constant 0 : i32
    return %c0_i32, %arg1 : i32, i32
  }
  func.func @transform_3(%arg0: i32, %arg1: i32, %arg2: i32) -> (i32, i32) {
    %c0_i32 = arith.constant 0 : i32
    return %arg0, %arg1 : i32, i32
  }
}

</mosaic_0001>

<llo_original>
// kernel: fused_multi_head_linear.1
$region0: #{fused_multi_head_linear.1}
  #allocation0 [shape = 'u32[]', space=smem, size = 0x4, offset = 0x4, fixed_abs, tag = 'smem constant byte address 0x4 - core index']
  #allocation1 [shape = 'u32[144,128]{1,0:T(1,128)}', space=vmem, size = 0x12000, scoped, tag = 'internal scratch']
  #allocation2 [shape = 'f32[8,128]{1,0:T(8,128)}', space=vmem, size = 0x1000, scoped, tag = 'scratch operand']
  %s0 = inlined_call_operand.vmem [shape: f32[8,128], index: 0, kind: input, shape index: {}]
  %s1 = inlined_call_operand.vmem [shape: f32[128,128], index: 1, kind: input, shape index: {}]
  %s2 = inlined_call_operand.vmem [shape: f32[1,128], index: 2, kind: input, shape index: {}]
  %s3 = inlined_call_operand.vmem [shape: f32[8,128], index: 3, kind: output, shape index: {}]
  %s4 = sld [smem:[#allocation0]]
  $region30: #{fused_multi_head_linear.1} parent=0
    _
  %s6 = ssub.s32 1, %s4
  %s7 = scalar_select 0, %s6, %s4
  // Predicated region
  $region2: #{fused_multi_head_linear.1} parent=0 // pred_check
    _
  $region3: #{fused_multi_head_linear.1} parent=0 // pred_check_branch
    %9 = sbr.rel (0) target = $region5
  $region4: #{fused_multi_head_linear.1} parent=0 // pred_region
    _
  $region5: #{fused_multi_head_linear.1} parent=0 // pred_fallthru
    _
  // Predicated region
  $region6: #{fused_multi_head_linear.1} parent=0 // pred_check
    _
  $region7: #{fused_multi_head_linear.1} parent=0 // pred_check_branch
    %11 = sbr.rel (0) target = $region9
  $region8: #{fused_multi_head_linear.1} parent=0 // pred_region
    _
  $region9: #{fused_multi_head_linear.1} parent=0 // pred_fallthru
    _
  // Predicated region
  $region10: #{fused_multi_head_linear.1} parent=0 // pred_check
    _
  $region11: #{fused_multi_head_linear.1} parent=0 // pred_check_branch
    %13 = sbr.rel (0) target = $region13
  $region12: #{fused_multi_head_linear.1} parent=0 // pred_region
    _
  $region13: #{fused_multi_head_linear.1} parent=0 // pred_fallthru
    _
  %p14 = scmp.eq.s32.totalorder 0, 0
  // Predicated region
  $region14: #{fused_multi_head_linear.1} parent=0 // pred_check
    %p15 = pneg %p14
  $region15: #{fused_multi_head_linear.1} parent=0 // pred_check_branch
    %17 = sbr.rel (%p15) target = $region17
  $region16: #{fused_multi_head_linear.1} parent=0 // pred_region
    %v18 = vld [vmem:[%s2] sm:$0x1]
    %v20 = vlaneseq
    %v21 = vshrl.u32 %v20, 7
    %v22 = vsub.s32 0, %v21
    %v23 = vrot.slane %v18, %v22
    %25 = vst [vmem:[#allocation2] sm:$0xff] %v23
  $region17: #{fused_multi_head_linear.1} parent=0 // pred_fallthru
    _
  %v26 = vld [vmem:[#allocation2] sm:$0xff]
  %v27 = vld [vmem:[%s0] sm:$0xff]
  %v28 = vld [vmem:[%s1] sm:$0xff]
  %v29 = vld [vmem:[%s1 + $0x8] sm:$0xff]
  %v30 = vld [vmem:[%s1 + $0x10] sm:$0xff]
  %v31 = vld [vmem:[%s1 + $0x18] sm:$0xff]
  %v32 = vld [vmem:[%s1 + $0x20] sm:$0xff]
  %v33 = vld [vmem:[%s1 + $0x28] sm:$0xff]
  %v34 = vld [vmem:[%s1 + $0x30] sm:$0xff]
  %v35 = vld [vmem:[%s1 + $0x38] sm:$0xff]
  %v36 = vld [vmem:[%s1 + $0x40] sm:$0xff]
  %v37 = vld [vmem:[%s1 + $0x48] sm:$0xff]
  %v38 = vld [vmem:[%s1 + $0x50] sm:$0xff]
  %v39 = vld [vmem:[%s1 + $0x58] sm:$0xff]
  %v40 = vld [vmem:[%s1 + $0x60] sm:$0xff]
  %v41 = vld [vmem:[%s1 + $0x68] sm:$0xff]
  %v42 = vld [vmem:[%s1 + $0x70] sm:$0xff]
  %v43 = vld [vmem:[%s1 + $0x78] sm:$0xff]
  %44 = vmatprep.subr.mxu0 0.0
  %45 = vmatpush1.msra.mxu0 %v28
  %46 = vmatprep.subr.mxu0 0.0
  %47 = vmatpush1.msra.mxu0 %v29
  %48 = vmatprep.subr.mxu0 0.0
  %49 = vmatpush1.msra.mxu0 %v30
  %50 = vmatprep.subr.mxu0 0.0
  %51 = vmatpush1.msra.mxu0 %v31
  %52 = vmatprep.subr.mxu0 0.0
  %53 = vmatpush1.msra.mxu0 %v32
  %54 = vmatprep.subr.mxu0 0.0
  %55 = vmatpush1.msra.mxu0 %v33
  %56 = vmatprep.subr.mxu0 0.0
  %57 = vmatpush1.msra.mxu0 %v34
  %58 = vmatprep.subr.mxu0 0.0
  %59 = vmatpush1.msra.mxu0 %v35
  %60 = vmatprep.subr.mxu0 0.0
  %61 = vmatpush1.msra.mxu0 %v36
  %62 = vmatprep.subr.mxu0 0.0
  %63 = vmatpush1.msra.mxu0 %v37
  %64 = vmatprep.subr.mxu0 0.0
  %65 = vmatpush1.msra.mxu0 %v38
  %66 = vmatprep.subr.mxu0 0.0
  %67 = vmatpush1.msra.mxu0 %v39
  %68 = vmatprep.subr.mxu0 0.0
  %69 = vmatpush1.msra.mxu0 %v40
  %70 = vmatprep.subr.mxu0 0.0
  %71 = vmatpush1.msra.mxu0 %v41
  %72 = vmatprep.subr.mxu0 0.0
  %73 = vmatpush1.msra.mxu0 %v42
  %74 = vmatprep.subr.mxu0 0.0
  %75 = vmatpush1.msra.mxu0 %v43
  %76 = vmatprep.subr.mxu0 0.0
  %77 = vmatpush1.msra.mxu0 0.0
  %78 = vmatprep.subr.mxu0 0.0
  %79 = vmatpush1.msra.mxu0 0.0
  %80 = vmatprep.subr.mxu0 0.0
  %81 = vmatpush1.msra.mxu0 0.0
  %82 = vmatprep.subr.mxu0 0.0
  %83 = vmatpush1.msra.mxu0 0.0
  %84 = vmatprep.subr.mxu0 0.0
  %85 = vmatpush1.msra.mxu0 0.0
  %86 = vmatprep.subr.mxu0 0.0
  %87 = vmatpush1.msra.mxu0 0.0
  %88 = vmatprep.subr.mxu0 0.0
  %89 = vmatpush1.msra.mxu0 0.0
  %90 = vmatprep.subr.mxu0 0.0
  %91 = vmatpush1.msra.mxu0 0.0
  %92 = vmatprep.subr.mxu0 0.0
  %93 = vmatpush1.msra.mxu0 0.0
  %94 = vmatprep.subr.mxu0 0.0
  %95 = vmatpush1.msra.mxu0 0.0
  %96 = vmatprep.subr.mxu0 0.0
  %97 = vmatpush1.msra.mxu0 0.0
  %98 = vmatprep.subr.mxu0 0.0
  %99 = vmatpush1.msra.mxu0 0.0
  %100 = vmatprep.subr.mxu0 0.0
  %101 = vmatpush1.msra.mxu0 0.0
  %102 = vmatprep.subr.mxu0 0.0
  %103 = vmatpush1.msra.mxu0 0.0
  %104 = vmatprep.subr.mxu0 0.0
  %105 = vmatpush1.msra.mxu0 0.0
  %106 = vmatprep.subr.mxu0 0.0
  %107 = vmatpush1.msra.mxu0 0.0
  %108 = vmatprep.mubr.f32.mxu0 0.0
  %109 = vmatmul.mubr.f32.gmra.mrb[0].mxu0 %v27
  %v110 = vpop.f32.mrb[0].mxu0
  %v111 = vadd.f32 0.0, %v110
  %v112 = vpop.f32.mrb[0].mxu0
  %113 = vdwg.mxu0
  %v114 = vadd.f32 %v26, %v111
  %115 = vst [vmem:[#allocation2] sm:$0xff] %v114
  // Predicated region
  $region18: #{fused_multi_head_linear.1} parent=0 // pred_check
    %p116 = pneg %p14
  $region19: #{fused_multi_head_linear.1} parent=0 // pred_check_branch
    %118 = sbr.rel (%p116) target = $region21
  $region20: #{fused_multi_head_linear.1} parent=0 // pred_region
    %v119 = vld [vmem:[#allocation2] sm:$0xff]
    %120 = vst [vmem:[%s3] sm:$0xff] %v119
  $region21: #{fused_multi_head_linear.1} parent=0 // pred_fallthru
    _
  // Predicated region
  $region22: #{fused_multi_head_linear.1} parent=0 // pred_check
    _
  $region23: #{fused_multi_head_linear.1} parent=0 // pred_check_branch
    %122 = sbr.rel (0) target = $region25
  $region24: #{fused_multi_head_linear.1} parent=0 // pred_region
    _
  $region25: #{fused_multi_head_linear.1} parent=0 // pred_fallthru
    _
  // Predicated region
  $region26: #{fused_multi_head_linear.1} parent=0 // pred_check
    _
  $region27: #{fused_multi_head_linear.1} parent=0 // pred_check_branch
    %124 = sbr.rel (0) target = $region29
  $region28: #{fused_multi_head_linear.1} parent=0 // pred_region
    _
  $region29: #{fused_multi_head_linear.1} parent=0 // pred_fallthru
    _

</llo_original>
